<compile_context>
chip_gen: v7x
topology: tpu7x:2x2x1
jax: 0.10.0
libtpu: 0.0.40
codegen_flags: <defaults>
</compile_context>

<pallas_src>
import jax
import jax.numpy as jnp
from jax.experimental import pallas as pl
from jax.experimental.pallas import tpu as pltpu


def _flatten_dma_kernel(x_hbm, o_hbm, sem):
    # Copy one contiguous chunk (row `i` of the slab) directly HBM -> HBM.
    # No VMEM staging, no vector body: the DMA engine does all the work.
    i = pl.program_id(0)
    cp = pltpu.make_async_copy(
        x_hbm.at[pl.ds(i, 1), :],
        o_hbm.at[pl.ds(i, 1), :],
        sem,
    )
    cp.start()
    cp.wait()


def _num_chunks(total: int, max_chunks: int = 8) -> int:
    """Largest power of two <= max_chunks that divides `total` (>= 1)."""
    n = 1
    while n * 2 <= max_chunks and total % (n * 2) == 0:
        n *= 2
    return n


def flatten(x: jax.Array) -> jax.Array:
    """Equivalent of torch Flatten: x.view(x.shape[0], -1)."""
    B = x.shape[0]
    D = 1
    for s in x.shape[1:]:
        D *= s
    total = B * D

    if total == 0:
        # Degenerate empty tensor — nothing to copy (metadata-only reshape).
        return x.reshape(B, D)

    # Split the flat buffer into a few large contiguous chunks.  >= 2 chunks
    # lets v7x's two TensorCores both drive DMAs; keeping the count small
    # (<= 8) makes per-DMA / per-grid-step overhead negligible even for huge
    # inputs, and each chunk is a plain contiguous byte range so no sublane /
    # lane alignment is ever required.
    nblk = _num_chunks(total, max_chunks=8)
    chunk = total // nblk

    # Row-major collapses are metadata-only; the kernel sees the (nblk, chunk)
    # slab and the result is re-viewed as (B, D) afterwards.
    x_slab = x.reshape(nblk, chunk)

    out_slab = pl.pallas_call(
        _flatten_dma_kernel,
        out_shape=jax.ShapeDtypeStruct((nblk, chunk), x.dtype),
        grid=(nblk,),
        in_specs=[pl.BlockSpec(memory_space=pl.ANY)],   # raw HBM ref, no auto-DMA
        out_specs=pl.BlockSpec(memory_space=pl.ANY),    # raw HBM ref, no auto-DMA
        scratch_shapes=[pltpu.SemaphoreType.DMA(())],
        compiler_params=pltpu.CompilerParams(
            dimension_semantics=("parallel",),
        ),
    )(x_slab)

    return out_slab.reshape(B, D)


if __name__ == "__main__":
    key = jax.random.PRNGKey(0)
    # Small NCHW input consistent with the module's forward.
    x = jax.random.normal(key, (2, 4, 16, 16), dtype=jnp.float32)

    out = flatten(x)
    out = jax.block_until_ready(out)

    # Reference check against plain JAX reshape (== torch .view semantics).
    ref = x.reshape(x.shape[0], -1)
    assert out.shape == (2, 4 * 16 * 16), out.shape
    assert out.dtype == x.dtype
    assert bool(jnp.array_equal(out, ref)), "mismatch vs reference flatten"

    print("KERNEL_OK")
</pallas_src>

<mosaic_0001>
module attributes {stable_mosaic.version = 11 : i64} {
  func.func @_flatten_dma_kernel(%arg0: i32, %arg1: memref<8x256xf32, #tpu.memory_space<any>>, %arg2: memref<8x256xf32, #tpu.memory_space<any>>, %arg3: memref<!tpu.dma_semaphore, #tpu.memory_space<semaphore_mem>>) attributes {dimension_semantics = [#tpu.dimension_semantics<parallel>], iteration_bounds = array<i64: 8>, scalar_prefetch = 0 : i64, scratch_operands = 1 : i64, tpu.core_type = #tpu.core_type<tc>, window_params = [{}, {}]} {
    %c0_i32 = arith.constant 0 : i32
    %0 = tpu.memref_slice %arg1[%arg0, %c0_i32] : memref<8x256xf32, #tpu.memory_space<any>> -> memref<1x256xf32, #tpu.memory_space<any>>
    %c0_i32_0 = arith.constant 0 : i32
    %1 = tpu.memref_slice %arg2[%arg0, %c0_i32_0] : memref<8x256xf32, #tpu.memory_space<any>> -> memref<1x256xf32, #tpu.memory_space<any>>
    tpu.enqueue_dma source(%0 : memref<1x256xf32, #tpu.memory_space<any>>) target(%1 : memref<1x256xf32, #tpu.memory_space<any>>) target_semaphore(%arg3 : memref<!tpu.dma_semaphore, #tpu.memory_space<semaphore_mem>>)
    %c0_i32_1 = arith.constant 0 : i32
    %2 = tpu.memref_slice %arg1[%arg0, %c0_i32_1] : memref<8x256xf32, #tpu.memory_space<any>> -> memref<1x256xf32, #tpu.memory_space<any>>
    %c0_i32_2 = arith.constant 0 : i32
    %3 = tpu.memref_slice %arg2[%arg0, %c0_i32_2] : memref<8x256xf32, #tpu.memory_space<any>> -> memref<1x256xf32, #tpu.memory_space<any>>
    tpu.wait_dma2 semaphore(%arg3 : memref<!tpu.dma_semaphore, #tpu.memory_space<semaphore_mem>>) src(%2 : memref<1x256xf32, #tpu.memory_space<any>>) dst(%3 : memref<1x256xf32, #tpu.memory_space<any>>)
    return
  }
}

</mosaic_0001>

<llo_original>
// kernel: tpu_custom_call.1
$region0: #{tpu_custom_call.1}
  #allocation0 [shape = 'u32[]', space=smem, size = 0x4, offset = 0x4, fixed_abs, tag = 'smem constant byte address 0x4 - core index']
  #allocation1 [shape = 'u32[144,128]{1,0:T(1,128)}', space=vmem, size = 0x12000, scoped, tag = 'internal scratch']
  #allocation2 [shape = 's32[1]{0}', space=sflag, size = 0x4, scoped, tag = 'scratch operand']
  #allocation3 [shape = 's32[]', space=sflag, size = 0x4, offset = 0, fixed_abs, tag = 'sflag constant byte address 0x0 - dummy sync flag']
  %s0 = inlined_call_operand.hbm [shape: f32[8,256], index: 0, kind: input, shape index: {}]
  %s1 = inlined_call_operand.hbm [shape: f32[8,256], index: 1, kind: output, shape index: {}]
  %s2 = sld [smem:[#allocation0]]
  $region9: #{tpu_custom_call.1} parent=0
    _
  %s4 = ssub.s32 1, %s2
  %s5 = scalar_select 0, %s4, %s2
  loop: start=0, step=1, limit=8
  $region2: #{tpu_custom_call.1} parent=0 // loop_pre_header
    _
  $region3: #{tpu_custom_call.1} parent=0 // loop_header
    %s7 = sphi 0, %s11
    %p8 = scmp.ge.s32.totalorder %s7, 8
  $region4: #{tpu_custom_call.1} parent=0 // loop_header_branch
    %10 = sbr.rel (%p8) target = $region8
  $region5: #{tpu_custom_call.1} parent=0 // loop_body
    #allocation4 [shape = 'u32[3]{0}', space=smem, size = 0xc, scoped, tag = 'DMA stride descriptor']
    %s12 = sadd.s32 %s7, 1
    %s13 = sshrl.u32 %s7, 3
    %s14 = sand.u32 %s7, 7
    %s15 = smul.u32 %s13, 16
    %s16 = sadd.s32 %s14, %s15
    %s17 = smul.addr %s16, 16
    %s18 = scalar_lea.hbm %s0, %s17
    %s19 = smul.addr %s16, 16
    %s20 = scalar_lea.hbm %s1, %s19
    %s22 = sshll.u32 1, 14
    %s23 = sxor.u32 4294967295, %s22
    %s26 = sshll.u32 3, 24
    %s27 = sxor.u32 4294967295, %s26
    %s28 = sand.u32 0, %s27
    %s30 = sor.u32 %s28, 0
    %33 = sst [smem:[#allocation4]] 128
    %s34 = scalar_lea.smem [#allocation4], 1
    %35 = sst [smem:[%s34]] 128
    %s36 = scalar_lea.smem [#allocation4], 2
    %37 = sst [smem:[%s36]] 1
    %39 = dma.general %s18, 32, %s20, [#allocation2], [#allocation3], [#allocation4], %s30, 0
    %s40 = smul.u32 1, 2
    %s41 = sshll.u32 %s40, 4
    %42 = dma.done [#allocation2], %s41
  $region6: #{tpu_custom_call.1} parent=0 // loop_footer
    %s11 = sadd.s32 1, %s7
  $region7: #{tpu_custom_call.1} parent=0 // loop_footer_branch
    %6 = sbr.rel target = $region3
  $region8: #{tpu_custom_call.1} parent=0 // loop_exit
    _
  %43 = vsyncmov [#allocation2]
  %s44 = vpop.sfrf %43
  %p45 = scmp.eq.s32.totalorder %s44, 0
  %p46 = pneg %p45
  %48 = shalt.err (%p46)

</llo_original>
